<compile_context>
chip_gen: v7x
topology: tpu7x:2x2x1
jax: 0.10.0
libtpu: 0.0.40
codegen_flags: <defaults>
</compile_context>

<pallas_src>
import math

import numpy as np
import jax
import jax.numpy as jnp
from jax.experimental import pallas as pl
from jax.experimental.pallas import tpu as pltpu


_VMEM_BUDGET = 24 * 1024 * 1024    # tile-footprint budget, safe on v5e/v6e/v7x
_VMEM_LIMIT = 32 * 1024 * 1024     # scoped VMEM limit handed to Mosaic
_TARGET_W_TILE = 2 * 1024 * 1024   # aim for ~2 MiB weight DMA per grid step
_MAX_BATCH_TILE = 1024             # review guidance: ~256-1024 rows per tile


def _round_up(x, m):
    return (x + m - 1) // m * m


def _cdiv(a, b):
    return -(-a // b)


# --------------------------------------------------------------------------
# Pallas kernel: one (batch-tile, lane-tile) block of y = x @ W^T + b
# --------------------------------------------------------------------------
def _linear_kernel(x_ref, w_ref, b_ref, o_ref):
    """Shapes:
      x_ref: (TB, D)   bf16  activation rows for this batch tile
      w_ref: (D, TF)   bf16  weight column tile (pre-transposed Linear weight)
      b_ref: (1, TF)   f32   bias tile (re-fetched only when the F tile changes)
      o_ref: (TB, TF)        output tile (f32 by default)
    """
    acc = jnp.dot(x_ref[...], w_ref[...], preferred_element_type=jnp.float32)
    o_ref[...] = (acc + b_ref[...]).astype(o_ref.dtype)


# --------------------------------------------------------------------------
# Tiling plans (shared by init and forward so the padded layout is consistent)
# --------------------------------------------------------------------------
def _plan_f_tiling(d, f):
    """Pick (tf, f_pad, n_f): lane tile (multiple of 128) sized so the weight
    column DMA is ~2 MiB, capped so <=3 weight buffers fit in half the VMEM
    budget, with F padded to n_f * tf (minimal balanced padding)."""
    f128 = _round_up(f, 128)
    # Target per-step weight DMA of ~_TARGET_W_TILE bytes (bf16 weights).
    tf = _round_up(max(_TARGET_W_TILE // (2 * d), 128), 128)
    # Keep up to 3 weight buffers within ~half the VMEM budget.
    max_tf = max(128, ((_VMEM_BUDGET // 2) // (3 * 2 * d)) // 128 * 128)
    tf = max(128, min(tf, max_tf, f128))
    # Balance tiles so padding waste stays small (tf must divide f_pad).
    n_f = max(1, _cdiv(f128, tf))
    tf = _round_up(_cdiv(f128, n_f), 128)
    f_pad = n_f * tf
    return tf, f_pad, n_f


def _pick_batch_tile(b, d, tf, out_itemsize):
    """Batch rows per tile so the x + output double-buffers fit in ~half the
    VMEM budget; multiple of 8 (sublane) unless the whole batch fits."""
    per_row = 2 * (tf * out_itemsize + d * 2)   # out + x double-buffers
    tb = (_VMEM_BUDGET // 2) // max(per_row, 1)
    tb = min(tb, _MAX_BATCH_TILE, b)
    if tb >= b:
        return b
    return max(8, tb // 8 * 8)


# --------------------------------------------------------------------------
# Wrapper: LatentToFeature.forward
# --------------------------------------------------------------------------
def latent_to_feature(x, params, target_shape, *, out_dtype=jnp.float32):
    """x: (B, latent_dim) -> (B, C, T), matching the PyTorch module."""
    c, t = target_shape
    b_sz, d = x.shape
    f = c * t
    w_t, bias = params["w_t"], params["b"]        # (D, F_pad) bf16, (1, F_pad) f32
    f_pad = w_t.shape[1]

    tf, f_pad_chk, n_f = _plan_f_tiling(d, f)
    assert f_pad_chk == f_pad, "params were initialized with a different plan"

    # Accept bf16 activations directly; only cast if the caller passed f32.
    if x.dtype != jnp.bfloat16:
        x = x.astype(jnp.bfloat16)

    out_itemsize = np.dtype(out_dtype).itemsize
    tb = _pick_batch_tile(b_sz, d, tf, out_itemsize)
    n_b = _cdiv(b_sz, tb)

    # Megacore (v7x has 2 TCs): if the whole problem is a single grid step and
    # the lane tile can be split lane-densely, split it so both cores get work.
    if n_f * n_b == 1 and tf % 256 == 0:
        tf //= 2
        n_f = 2

    # When the per-step weight DMA is forced to be small, deepen its pipeline
    # to hide DMA issue latency (issue-latency bound, not bandwidth bound).
    w_spec_kwargs = {}
    if d * tf * 2 < 512 * 1024 and n_f >= 3:
        w_spec_kwargs["pipeline_mode"] = pl.Buffered(3)

    cost = pl.CostEstimate(
        flops=2 * b_sz * d * f_pad,
        transcendentals=0,
        bytes_accessed=(d * f_pad * 2            # weight (read once)
                        + n_f * b_sz * d * 2     # activations (re-streamed per F tile)
                        + b_sz * f_pad * out_itemsize
                        + f_pad * 4),            # bias
    )

    out = pl.pallas_call(
        _linear_kernel,
        out_shape=jax.ShapeDtypeStruct((b_sz, f_pad), out_dtype),
        grid_spec=pltpu.PrefetchScalarGridSpec(
            num_scalar_prefetch=0,
            # F-tile outer, batch inner: each weight tile DMA'd exactly once,
            # the (small) activation tile re-streams across the inner axis.
            grid=(n_f, n_b),
            in_specs=[
                pl.BlockSpec((tb, d), lambda j, i: (i, 0)),                  # x
                pl.BlockSpec((d, tf), lambda j, i: (0, j), **w_spec_kwargs),  # W^T cols
                pl.BlockSpec((1, tf), lambda j, i: (0, j)),                  # bias
            ],
            out_specs=pl.BlockSpec((tb, tf), lambda j, i: (i, j)),
        ),
        compiler_params=pltpu.CompilerParams(
            dimension_semantics=("parallel", "parallel"),
            vmem_limit_bytes=_VMEM_LIMIT,
        ),
        cost_estimate=cost,
    )(x, w_t, bias)

    # Drop the lane padding and apply the module's free view to (B, C, T).
    return out[:, :f].reshape(b_sz, c, t)


def init_latent_to_feature_params(key, latent_dim, target_shape):
    """nn.Linear default init; weight transposed to (D, F) bf16 once and
    zero-padded (with bias) to a lane-dense F_pad decided by the tiling plan."""
    c, t = target_shape
    f = c * t
    _, f_pad, _ = _plan_f_tiling(latent_dim, f)

    k_w, k_b = jax.random.split(key)
    bound = 1.0 / math.sqrt(latent_dim)
    w = jax.random.uniform(k_w, (f, latent_dim), jnp.float32, -bound, bound)
    b = jax.random.uniform(k_b, (f,), jnp.float32, -bound, bound)

    w_t = jnp.zeros((latent_dim, f_pad), jnp.bfloat16)
    w_t = w_t.at[:, :f].set(jnp.transpose(w).astype(jnp.bfloat16))
    b_pad = jnp.zeros((1, f_pad), jnp.float32).at[0, :f].set(b)
    return {"w_t": w_t, "b": b_pad}


if __name__ == "__main__":
    latent_dim = 32
    target_shape = (6, 20)      # (channels, timesteps) -> F = 120, padded to 128
    batch = 2

    key = jax.random.PRNGKey(0)
    key, kx, kp = jax.random.split(key, 3)
    # Pass bf16 activations directly (no per-call cast inside the wrapper).
    x = jax.random.normal(kx, (batch, latent_dim), jnp.float32).astype(jnp.bfloat16)
    params = init_latent_to_feature_params(kp, latent_dim, target_shape)

    out = jax.block_until_ready(latent_to_feature(x, params, target_shape))
    assert out.shape == (batch,) + target_shape, out.shape

    # Pure-JAX reference with identical bf16-in / f32-accumulate numerics.
    # TODO(synk): reference shares the bf16 cast with the kernel, so it checks
    # kernel correctness, not bf16-vs-fp32 drift relative to the fp32 nn.Linear.
    c, t = target_shape
    f = c * t
    ref_full = x.astype(jnp.float32) @ params["w_t"].astype(jnp.float32) + params["b"]
    ref = ref_full[:, :f].reshape(batch, c, t)
    np.testing.assert_allclose(np.asarray(out), np.asarray(ref),
                               rtol=2e-3, atol=2e-3)

    print("KERNEL_OK")
</pallas_src>

<mosaic_0001>
module attributes {stable_mosaic.version = 11 : i64} {
  func.func @_linear_kernel(%arg0: i32, %arg1: i32, %arg2: memref<2x32xbf16, #tpu.memory_space<vmem>>, %arg3: memref<32x128xbf16, #tpu.memory_space<vmem>>, %arg4: memref<1x128xf32, #tpu.memory_space<vmem>>, %arg5: memref<2x128xf32, #tpu.memory_space<vmem>>) attributes {dimension_semantics = [#tpu.dimension_semantics<parallel>, #tpu.dimension_semantics<parallel>], iteration_bounds = array<i64: 1, 1>, scalar_prefetch = 0 : i64, scratch_operands = 0 : i64, tpu.core_type = #tpu.core_type<tc>, window_params = [{transform_indices = @transform_0, window_bounds = array<i64: 2, 32>}, {transform_indices = @transform_1, window_bounds = array<i64: 32, 128>}, {transform_indices = @transform_2, window_bounds = array<i64: 1, 128>}, {transform_indices = @transform_3, window_bounds = array<i64: 2, 128>}]} {
    %c0 = arith.constant 0 : index
    %c0_0 = arith.constant 0 : index
    %0 = vector.load %arg2[%c0, %c0_0] : memref<2x32xbf16, #tpu.memory_space<vmem>>, vector<2x32xbf16>
    %c0_1 = arith.constant 0 : index
    %c0_2 = arith.constant 0 : index
    %1 = vector.load %arg3[%c0_1, %c0_2] : memref<32x128xbf16, #tpu.memory_space<vmem>>, vector<32x128xbf16>
    %cst = arith.constant dense<0.000000e+00> : vector<2x128xf32>
    %2 = tpu.matmul %0, %1, %cst {dimension_numbers = #tpu.dot_dimension_numbers<[1], [0], [0], [1], [0, 0, 1, 1], [], []>} : vector<2x32xbf16>, vector<32x128xbf16>, vector<2x128xf32> -> vector<2x128xf32>
    %c0_3 = arith.constant 0 : index
    %c0_4 = arith.constant 0 : index
    %3 = vector.load %arg4[%c0_3, %c0_4] : memref<1x128xf32, #tpu.memory_space<vmem>>, vector<1x128xf32>
    %4 = vector.broadcast %3 : vector<1x128xf32> to vector<2x128xf32>
    %5 = arith.addf %2, %4 : vector<2x128xf32>
    %c0_5 = arith.constant 0 : index
    %c0_6 = arith.constant 0 : index
    %6 = vector.load %arg5[%c0_5, %c0_6] : memref<2x128xf32, #tpu.memory_space<vmem>>, vector<2x128xf32>
    tpu.vector_store %arg5[%c0_5, %c0_6], %5 {strides = array<i32>} : memref<2x128xf32, #tpu.memory_space<vmem>>, vector<2x128xf32>,
    return
  }
  func.func @transform_0(%arg0: i32, %arg1: i32) -> (i32, i32) {
    %c0_i32 = arith.constant 0 : i32
    %c0_i32_0 = arith.constant 0 : i32
    return %arg1, %c0_i32 : i32, i32
  }
  func.func @transform_1(%arg0: i32, %arg1: i32) -> (i32, i32) {
    %c0_i32 = arith.constant 0 : i32
    %c0_i32_0 = arith.constant 0 : i32
    return %c0_i32, %arg0 : i32, i32
  }
  func.func @transform_2(%arg0: i32, %arg1: i32) -> (i32, i32) {
    %c0_i32 = arith.constant 0 : i32
    %c0_i32_0 = arith.constant 0 : i32
    return %c0_i32, %arg0 : i32, i32
  }
  func.func @transform_3(%arg0: i32, %arg1: i32) -> (i32, i32) {
    %c0_i32 = arith.constant 0 : i32
    return %arg1, %arg0 : i32, i32
  }
}

</mosaic_0001>

<llo_original>
// kernel: tpu_custom_call.1
$region0: #{tpu_custom_call.1}
  #allocation0 [shape = 'u32[]', space=smem, size = 0x4, offset = 0x4, fixed_abs, tag = 'smem constant byte address 0x4 - core index']
  #allocation1 [shape = 'u32[144,128]{1,0:T(1,128)}', space=vmem, size = 0x12000, scoped, tag = 'internal scratch']
  %s0 = inlined_call_operand.hbm [shape: bf16[2,32], index: 0, kind: input, shape index: {}]
  %s1 = inlined_call_operand.hbm [shape: bf16[32,128], index: 1, kind: input, shape index: {}]
  %s2 = inlined_call_operand.vmem [shape: f32[1,128], index: 2, kind: input, shape index: {}]
  %s3 = inlined_call_operand.hbm [shape: f32[2,128], index: 3, kind: output, shape index: {}]
  %s4 = sld [smem:[#allocation0]]
  $region30: #{tpu_custom_call.1} parent=0
    _
  %s6 = ssub.s32 1, %s4
  %s7 = scalar_select 0, %s6, %s4
  $region1: #{tpu_custom_call.1} parent=0
    #allocation2 [shape = 'u8[512]{0}', space=vmem, size = 0x400, scoped, tag = 'input window, operand 0, single buffered']
    #allocation3 [shape = 's32[1]{0}', space=sflag, size = 0x4, scoped, tag = 'scoped memory for tpu_custom_call.1']
    #allocation4 [shape = 's32[1]{0}', space=sflag, size = 0x4, scoped, tag = 'scoped memory for tpu_custom_call.1']
    #allocation5 [shape = 'u8[8192]{0}', space=vmem, size = 0x2000, scoped, tag = 'input window, operand 1, single buffered']
    #allocation6 [shape = 's32[1]{0}', space=sflag, size = 0x4, scoped, tag = 'scoped memory for tpu_custom_call.1']
    #allocation7 [shape = 'u8[1024]{0}', space=vmem, size = 0x400, scoped, tag = 'output window, operand 0, single buffered']
    %8 = vsyncpa [#allocation3], 0
    %9 = vsyncpa [#allocation6], 0
    %10 = vsyncpa [#allocation4], 0
    // Predicated region
    $region2: #{tpu_custom_call.1} parent=1 // pred_check
      _
    $region3: #{tpu_custom_call.1} parent=1 // pred_check_branch
      %12 = sbr.rel (0) target = $region5
    $region4: #{tpu_custom_call.1} parent=1 // pred_region
      %s14 = ssub.s32 16, 16
      %15 = vsyncadd [#allocation3], %s14
      %s17 = sshll.u32 [#allocation2], 4
      %s18 = int_to_ptr.vmem [resolvable:$true] %s17
      %20 = dma.hbm_to_vmem [thread:$0]  %s0, 16, %s18, [#allocation3]
    $region5: #{tpu_custom_call.1} parent=1 // pred_fallthru
      _
    // Predicated region
    $region6: #{tpu_custom_call.1} parent=1 // pred_check
      _
    $region7: #{tpu_custom_call.1} parent=1 // pred_check_branch
      %22 = sbr.rel (0) target = $region9
    $region8: #{tpu_custom_call.1} parent=1 // pred_region
      %s24 = ssub.s32 256, 256
      %25 = vsyncadd [#allocation6], %s24
      %s26 = sshll.u32 [#allocation5], 4
      %s27 = int_to_ptr.vmem [resolvable:$true] %s26
      %32 = dma.hbm_to_vmem [thread:$0]  %s1, 256, %s27, [#allocation6], 64, 64, 4
    $region9: #{tpu_custom_call.1} parent=1 // pred_fallthru
      _
    // Predicated region
    $region10: #{tpu_custom_call.1} parent=1 // pred_check
      _
    $region11: #{tpu_custom_call.1} parent=1 // pred_check_branch
      %34 = sbr.rel (0) target = $region13
    $region12: #{tpu_custom_call.1} parent=1 // pred_region
      _
    $region13: #{tpu_custom_call.1} parent=1 // pred_fallthru
      _
    // Predicated region
    $region14: #{tpu_custom_call.1} parent=1 // pred_check
      _
    $region15: #{tpu_custom_call.1} parent=1 // pred_check_branch
      %36 = sbr.rel (0) target = $region17
    $region16: #{tpu_custom_call.1} parent=1 // pred_region
      %37 = dma.done [#allocation3], 16
    $region17: #{tpu_custom_call.1} parent=1 // pred_fallthru
      _
    // Predicated region
    $region18: #{tpu_custom_call.1} parent=1 // pred_check
      _
    $region19: #{tpu_custom_call.1} parent=1 // pred_check_branch
      %39 = sbr.rel (0) target = $region21
    $region20: #{tpu_custom_call.1} parent=1 // pred_region
      %40 = dma.done [#allocation6], 256
    $region21: #{tpu_custom_call.1} parent=1 // pred_fallthru
      _
    %v42 = vld [vmem:[#allocation2] sm:$0x1]
    %v43 = vld [vmem:[#allocation5] sm:$0xf]
    %v44 = vld [vmem:[#allocation5 + $0x4] sm:$0xf]
    %v45 = vld [vmem:[#allocation5 + $0x8] sm:$0xf]
    %v46 = vld [vmem:[#allocation5 + $0xc] sm:$0xf]
    %v47 = vld [vmem:[%s2] sm:$0x1]
    %v49 = vlaneseq
    %v50 = vshrl.u32 %v49, 7
    %v51 = vsub.s32 0, %v50
    %v52 = vrot.slane %v47, %v51
    %v58 = vunpack.c.l.b16 %v43
    %v59 = vunpack.c.l.b16 %v44
    %v60 = vunpack.c.l.b16 %v45
    %v61 = vunpack.c.l.b16 %v46
    %v62 = vpack.c.b16 %v59, %v58
    %v63 = vpack.c.b16 %v61, %v60
    %vm66 = vcmask 261120
    %v68 = vsel %vm66, %v42, 0
    %70 = vmatprep.subr.bf16.mxu0 0
    %71 = vmatpush1.bf16.msra.mxu0 %v62
    %72 = vmatprep.subr.bf16.mxu0 0
    %73 = vmatpush1.bf16.msra.mxu0 %v63
    %74 = vmatprep.subr.bf16.mxu0 0
    %75 = vmatpush1.bf16.msra.mxu0 0
    %76 = vmatprep.subr.bf16.mxu0 0
    %77 = vmatpush1.bf16.msra.mxu0 0
    %78 = vmatprep.subr.bf16.mxu0 0
    %79 = vmatpush1.bf16.msra.mxu0 0
    %80 = vmatprep.subr.bf16.mxu0 0
    %81 = vmatpush1.bf16.msra.mxu0 0
    %82 = vmatprep.subr.bf16.mxu0 0
    %83 = vmatpush1.bf16.msra.mxu0 0
    %84 = vmatprep.subr.bf16.mxu0 0
    %85 = vmatpush1.bf16.msra.mxu0 0
    %86 = vmatprep.subr.bf16.mxu0 0
    %87 = vmatpush1.bf16.msra.mxu0 0
    %88 = vmatprep.subr.bf16.mxu0 0
    %89 = vmatpush1.bf16.msra.mxu0 0
    %90 = vmatprep.subr.bf16.mxu0 0
    %91 = vmatpush1.bf16.msra.mxu0 0
    %92 = vmatprep.subr.bf16.mxu0 0
    %93 = vmatpush1.bf16.msra.mxu0 0
    %94 = vmatprep.subr.bf16.mxu0 0
    %95 = vmatpush1.bf16.msra.mxu0 0
    %96 = vmatprep.subr.bf16.mxu0 0
    %97 = vmatpush1.bf16.msra.mxu0 0
    %98 = vmatprep.subr.bf16.mxu0 0
    %99 = vmatpush1.bf16.msra.mxu0 0
    %100 = vmatprep.subr.bf16.mxu0 0
    %101 = vmatpush1.bf16.msra.mxu0 0
    %102 = vmatprep.mubr.bf16.mxu0 0
    %103 = vmatmul.mubr.bf16.gmra.mrb[0].mxu0 %v68
    %v104 = vpop.f32.mrb[0].mxu0
    %v105 = vadd.f32 %v52, %v104
    %v106 = vpop.f32.mrb[0].mxu0
    %v107 = vpop.f32.mrb[0].mxu0
    %v108 = vpop.f32.mrb[0].mxu0
    %109 = vdwg.mxu0
    %110 = vst [vmem:[#allocation7] sm:$0x3] %v105
    // Predicated region
    $region22: #{tpu_custom_call.1} parent=1 // pred_check
      _
    $region23: #{tpu_custom_call.1} parent=1 // pred_check_branch
      %112 = sbr.rel (0) target = $region25
    $region24: #{tpu_custom_call.1} parent=1 // pred_region
      %s114 = ssub.s32 32, 32
      %115 = vsyncadd [#allocation4], %s114
      %s117 = sshll.u32 [#allocation7], 4
      %s118 = int_to_ptr.vmem [resolvable:$true] %s117
      %120 = dma.vmem_to_hbm [thread:$0]  %s118, 32, %s3, [#allocation4]
    $region25: #{tpu_custom_call.1} parent=1 // pred_fallthru
      _
    // Predicated region
    $region26: #{tpu_custom_call.1} parent=1 // pred_check
      _
    $region27: #{tpu_custom_call.1} parent=1 // pred_check_branch
      %122 = sbr.rel (0) target = $region29
    $region28: #{tpu_custom_call.1} parent=1 // pred_region
      %123 = dma.done [#allocation4], 32
    $region29: #{tpu_custom_call.1} parent=1 // pred_fallthru
      _
    %124 = vsyncpa [#allocation3], 1
    %125 = vsyncpa [#allocation6], 1
    %126 = vsyncpa [#allocation4], 1

</llo_original>
